<compile_context>
chip_gen: v7x
topology: tpu7x:2x2x1
jax: 0.10.0
libtpu: 0.0.40
codegen_flags: <defaults>
</compile_context>

<pallas_src>
import functools

import jax
import jax.numpy as jnp
from jax import lax
from jax.experimental import pallas as pl
from jax.experimental.pallas import tpu as pltpu


def _round_up(n, m):
    return ((n + m - 1) // m) * m


def _cdiv(a, b):
    return -(-a // b)


def _sim_kernel(x_ref, y_ref, o_ref, *, inv_eps, inv_temp):
    # x_ref: (tm, H), y_ref: (tn, H) in the input dtype; o_ref: (tm, tn).
    xf = x_ref[...].astype(jnp.float32)
    yf = y_ref[...].astype(jnp.float32)
    # Clamped inverse norms, computed in-kernel from tiles already in VMEM
    # (torch clamps each norm to eps before dividing).  All-zero (padded)
    # rows give rsqrt(0)=inf -> clamp -> finite, and 0 * finite == 0.
    inv_x = jnp.minimum(lax.rsqrt(jnp.sum(xf * xf, axis=-1, keepdims=True)), inv_eps)
    inv_y = jnp.minimum(lax.rsqrt(jnp.sum(yf * yf, axis=-1, keepdims=True)), inv_eps)
    xn = (xf * inv_x).astype(x_ref.dtype)   # unit rows, native dtype for the MXU
    yn = (yf * inv_y).astype(y_ref.dtype)
    sim = lax.dot_general(
        xn, yn,
        dimension_numbers=(((1,), (1,)), ((), ())),   # contract last dims: A @ B^T
        preferred_element_type=jnp.float32,            # MXU, f32 accumulation
    )                                                  # (tm, tn) f32
    o_ref[...] = (sim * inv_temp).astype(o_ref.dtype)


def _vmem_need_bytes(tm, tn, h, in_bytes, out_bytes):
    # Double-buffered x/y/out tiles + in-kernel f32 temporaries (casts,
    # normalized copies, f32 dot result).
    x_bufs = 2 * tm * h * in_bytes
    y_bufs = 2 * tn * h * in_bytes
    o_bufs = 2 * tm * tn * out_bytes
    temps = 4 * (tm * h + tn * h + tm * tn) + in_bytes * (tm * h + tn * h)
    return x_bufs + y_bufs + o_bufs + temps


def _choose_tiles(b1, b2, h, in_bytes, out_bytes, vmem_budget):
    TM_CAP = 512
    TN_CAP = 512
    tm = min(TM_CAP, _round_up(b1, 8))

    # Prefer a fully resident y (single j block -> one DMA of y total).
    b2_128 = _round_up(b2, 128)
    if _vmem_need_bytes(tm, b2_128, h, in_bytes, out_bytes) <= vmem_budget:
        tn = b2_128
    else:
        n_j = _cdiv(b2, TN_CAP)
        tn = _round_up(_cdiv(b2, n_j), 128)   # padding-minimizing 128-multiple

    # v7x megacore: keep at least 2 grid steps along a "parallel" axis.
    n_i = _cdiv(_round_up(b1, 8), tm)
    n_j = _cdiv(_round_up(b2, 128), tn)
    if n_i * n_j < 2 and b1 > 8:
        tm = _round_up(_cdiv(b1, 2), 8)

    # Shrink until the footprint fits the per-generation VMEM budget.
    while _vmem_need_bytes(tm, tn, h, in_bytes, out_bytes) > vmem_budget:
        if tm > 8 and tm >= tn:
            tm = _round_up(tm // 2, 8)
        elif tn > 128:
            tn = _round_up(tn // 2, 128)
        elif tm > 8:
            tm = _round_up(tm // 2, 8)
        else:
            break
    return tm, tn


def similarity(x, y, temp, eps=1e-8, tm=None, tn=None):
    """Pairwise cosine similarity divided by temp.

    x: (B1, H), y: (B2, H)  ->  (B1, B2)
    Equivalent to torch: Similarity(temp)(x.unsqueeze(1), y.unsqueeze(0)).
    """
    b1, h = x.shape
    b2, h2 = y.shape
    assert h == h2, "hidden dims must match"

    out_dtype = jnp.promote_types(x.dtype, y.dtype)
    in_bytes = max(jnp.dtype(x.dtype).itemsize, jnp.dtype(y.dtype).itemsize)
    out_bytes = jnp.dtype(out_dtype).itemsize

    # Size against the actual generation's VMEM (64 MiB/TC on v7x, 128 MiB on
    # v5e/v6e); fall back to the most restrictive (v7x) if the query fails.
    try:
        vmem_cap = int(pltpu.get_tpu_info().vmem_capacity_bytes)
    except Exception:
        vmem_cap = 64 << 20
    vmem_budget = (vmem_cap * 3) // 4

    if tm is None or tn is None:
        tm_auto, tn_auto = _choose_tiles(b1, b2, h, in_bytes, out_bytes, vmem_budget)
        tm = tm_auto if tm is None else tm
        tn = tn_auto if tn is None else tn

    b1p = _round_up(b1, tm)
    b2p = _round_up(b2, tn)
    xp = x if b1p == b1 else jnp.pad(x, ((0, b1p - b1), (0, 0)))
    yp = y if b2p == b2 else jnp.pad(y, ((0, b2p - b2), (0, 0)))

    n_i, n_j = b1p // tm, b2p // tn
    need = _vmem_need_bytes(tm, tn, h, in_bytes, out_bytes)
    vmem_limit = int(min(vmem_budget, max(need + (4 << 20), 16 << 20)))

    kernel = functools.partial(
        _sim_kernel, inv_eps=float(1.0 / eps), inv_temp=float(1.0 / temp)
    )

    out = pl.pallas_call(
        kernel,
        out_shape=jax.ShapeDtypeStruct((b1p, b2p), out_dtype),
        grid_spec=pltpu.PrefetchScalarGridSpec(
            num_scalar_prefetch=0,
            grid=(n_i, n_j),
            in_specs=[
                pl.BlockSpec((tm, h), lambda i, j: (i, 0)),   # x row-tile
                pl.BlockSpec((tn, h), lambda i, j: (j, 0)),   # y row-tile (DMA'd once when n_j == 1)
            ],
            out_specs=pl.BlockSpec((tm, tn), lambda i, j: (i, j)),
        ),
        compiler_params=pltpu.CompilerParams(
            dimension_semantics=("parallel", "parallel"),
            vmem_limit_bytes=vmem_limit,
        ),
    )(xp, yp)

    return out[:b1, :b2]


if __name__ == "__main__":
    key = jax.random.PRNGKey(0)
    kx, ky, ka, kb = jax.random.split(key, 4)

    temp = 0.05  # SNCSE default temperature

    def ref(x, y, temp, eps=1e-8):
        xn = jnp.maximum(jnp.linalg.norm(x, axis=-1, keepdims=True), eps)
        yn = jnp.maximum(jnp.linalg.norm(y, axis=-1, keepdims=True), eps)
        return ((x / xn) @ (y / yn).T) / temp

    # Small SimCSE-like shapes: batch=8, hidden=32.
    B, H = 8, 32
    x = jax.random.normal(kx, (B, H), dtype=jnp.float32)
    y = jax.random.normal(ky, (B, H), dtype=jnp.float32)
    out = similarity(x, y, temp)
    jax.block_until_ready(out)
    assert out.shape == (B, B)
    assert jnp.allclose(out, ref(x, y, temp), atol=1e-4, rtol=1e-4)

    # Non-square / padding path (B1 != B2, neither a multiple of the tiles).
    a = jax.random.normal(ka, (6, H), dtype=jnp.float32)
    b = jax.random.normal(kb, (10, H), dtype=jnp.float32)
    out2 = similarity(a, b, temp)
    jax.block_until_ready(out2)
    assert out2.shape == (6, 10)
    assert jnp.allclose(out2, ref(a, b, temp), atol=1e-4, rtol=1e-4)

    print("KERNEL_OK")
</pallas_src>

<mosaic_0001>
module attributes {stable_mosaic.version = 11 : i64} {
  func.func @_sim_kernel(%arg0: i32, %arg1: i32, %arg2: memref<8x32xf32, #tpu.memory_space<vmem>>, %arg3: memref<128x32xf32, #tpu.memory_space<vmem>>, %arg4: memref<8x128xf32, #tpu.memory_space<vmem>>) attributes {dimension_semantics = [#tpu.dimension_semantics<parallel>, #tpu.dimension_semantics<parallel>], iteration_bounds = array<i64: 1, 1>, scalar_prefetch = 0 : i64, scratch_operands = 0 : i64, tpu.core_type = #tpu.core_type<tc>, window_params = [{transform_indices = @transform_0, window_bounds = array<i64: 8, 32>}, {transform_indices = @transform_1, window_bounds = array<i64: 128, 32>}, {transform_indices = @transform_2, window_bounds = array<i64: 8, 128>}]} {
    %c0 = arith.constant 0 : index
    %c0_0 = arith.constant 0 : index
    %0 = vector.load %arg2[%c0, %c0_0] : memref<8x32xf32, #tpu.memory_space<vmem>>, vector<8x32xf32>
    %c0_1 = arith.constant 0 : index
    %c0_2 = arith.constant 0 : index
    %1 = vector.load %arg3[%c0_1, %c0_2] : memref<128x32xf32, #tpu.memory_space<vmem>>, vector<128x32xf32>
    %2 = arith.mulf %0, %0 : vector<8x32xf32>
    %cst = arith.constant dense<0.000000e+00> : vector<8xf32>
    %3 = vector.multi_reduction <add>, %2, %cst [1] : vector<8x32xf32> to vector<8xf32>
    %4 = vector.shape_cast %3 : vector<8xf32> to vector<8x1xf32>
    %5 = math.rsqrt %4 : vector<8x1xf32>
    %cst_3 = arith.constant 1.000000e+08 : f32
    %6 = vector.broadcast %cst_3 : f32 to vector<8x1xf32>
    %7 = arith.minimumf %5, %6 : vector<8x1xf32>
    %8 = arith.mulf %1, %1 : vector<128x32xf32>
    %cst_4 = arith.constant dense<0.000000e+00> : vector<128xf32>
    %9 = vector.multi_reduction <add>, %8, %cst_4 [1] : vector<128x32xf32> to vector<128xf32>
    %10 = vector.shape_cast %9 : vector<128xf32> to vector<128x1xf32>
    %11 = math.rsqrt %10 : vector<128x1xf32>
    %cst_5 = arith.constant 1.000000e+08 : f32
    %12 = vector.broadcast %cst_5 : f32 to vector<128x1xf32>
    %13 = arith.minimumf %11, %12 : vector<128x1xf32>
    %14 = vector.broadcast %7 : vector<8x1xf32> to vector<8x32xf32>
    %15 = arith.mulf %0, %14 : vector<8x32xf32>
    %16 = vector.broadcast %13 : vector<128x1xf32> to vector<128x32xf32>
    %17 = arith.mulf %1, %16 : vector<128x32xf32>
    %cst_6 = arith.constant dense<0.000000e+00> : vector<8x128xf32>
    %18 = tpu.matmul %15, %17, %cst_6 {dimension_numbers = #tpu.dot_dimension_numbers<[1], [1], [0], [0], [0, 0, 1, 0], [], []>} : vector<8x32xf32>, vector<128x32xf32>, vector<8x128xf32> -> vector<8x128xf32>
    %cst_7 = arith.constant 2.000000e+01 : f32
    %19 = vector.broadcast %cst_7 : f32 to vector<8x128xf32>
    %20 = arith.mulf %18, %19 : vector<8x128xf32>
    %c0_8 = arith.constant 0 : index
    %c0_9 = arith.constant 0 : index
    %21 = vector.load %arg4[%c0_8, %c0_9] : memref<8x128xf32, #tpu.memory_space<vmem>>, vector<8x128xf32>
    tpu.vector_store %arg4[%c0_8, %c0_9], %20 {strides = array<i32>} : memref<8x128xf32, #tpu.memory_space<vmem>>, vector<8x128xf32>,
    return
  }
  func.func @transform_0(%arg0: i32, %arg1: i32) -> (i32, i32) {
    %c0_i32 = arith.constant 0 : i32
    %c0_i32_0 = arith.constant 0 : i32
    return %arg0, %c0_i32 : i32, i32
  }
  func.func @transform_1(%arg0: i32, %arg1: i32) -> (i32, i32) {
    %c0_i32 = arith.constant 0 : i32
    %c0_i32_0 = arith.constant 0 : i32
    return %arg1, %c0_i32 : i32, i32
  }
  func.func @transform_2(%arg0: i32, %arg1: i32) -> (i32, i32) {
    %c0_i32 = arith.constant 0 : i32
    return %arg0, %arg1 : i32, i32
  }
}

</mosaic_0001>

<llo_original>
// kernel: tpu_custom_call.1
$region0: #{tpu_custom_call.1}
  #allocation0 [shape = 'u32[]', space=smem, size = 0x4, offset = 0x4, fixed_abs, tag = 'smem constant byte address 0x4 - core index']
  #allocation1 [shape = 'u32[144,128]{1,0:T(1,128)}', space=vmem, size = 0x12000, scoped, tag = 'internal scratch']
  %s0 = inlined_call_operand.vmem [shape: f32[8,32], index: 0, kind: input, shape index: {}]
  %s1 = inlined_call_operand.vmem [shape: f32[128,32], index: 1, kind: input, shape index: {}]
  %s2 = inlined_call_operand.hbm [shape: f32[8,128], index: 2, kind: output, shape index: {}]
  %s3 = sld [smem:[#allocation0]]
  $region18: #{tpu_custom_call.1} parent=0
    _
  %s5 = ssub.s32 1, %s3
  %s6 = scalar_select 0, %s5, %s3
  $region1: #{tpu_custom_call.1} parent=0
    #allocation2 [shape = 'u8[4096]{0}', space=vmem, size = 0x1000, scoped, tag = 'output window, operand 0, single buffered']
    #allocation3 [shape = 's32[1]{0}', space=sflag, size = 0x4, scoped, tag = 'scoped memory for tpu_custom_call.1']
    %7 = vsyncpa [#allocation3], 0
    // Predicated region
    $region2: #{tpu_custom_call.1} parent=1 // pred_check
      _
    $region3: #{tpu_custom_call.1} parent=1 // pred_check_branch
      %9 = sbr.rel (0) target = $region5
    $region4: #{tpu_custom_call.1} parent=1 // pred_region
      _
    $region5: #{tpu_custom_call.1} parent=1 // pred_fallthru
      _
    // Predicated region
    $region6: #{tpu_custom_call.1} parent=1 // pred_check
      _
    $region7: #{tpu_custom_call.1} parent=1 // pred_check_branch
      %11 = sbr.rel (0) target = $region9
    $region8: #{tpu_custom_call.1} parent=1 // pred_region
      _
    $region9: #{tpu_custom_call.1} parent=1 // pred_fallthru
      _
    %v12 = vld [vmem:[%s0] sm:$0xff]
    %v13 = vld [vmem:[%s1] sm:$0xff]
    %v14 = vld [vmem:[%s1 + $0x8] sm:$0xff]
    %v15 = vld [vmem:[%s1 + $0x10] sm:$0xff]
    %v16 = vld [vmem:[%s1 + $0x18] sm:$0xff]
    %v17 = vld [vmem:[%s1 + $0x20] sm:$0xff]
    %v18 = vld [vmem:[%s1 + $0x28] sm:$0xff]
    %v19 = vld [vmem:[%s1 + $0x30] sm:$0xff]
    %v20 = vld [vmem:[%s1 + $0x38] sm:$0xff]
    %v21 = vld [vmem:[%s1 + $0x40] sm:$0xff]
    %v22 = vld [vmem:[%s1 + $0x48] sm:$0xff]
    %v23 = vld [vmem:[%s1 + $0x50] sm:$0xff]
    %v24 = vld [vmem:[%s1 + $0x58] sm:$0xff]
    %v25 = vld [vmem:[%s1 + $0x60] sm:$0xff]
    %v26 = vld [vmem:[%s1 + $0x68] sm:$0xff]
    %v27 = vld [vmem:[%s1 + $0x70] sm:$0xff]
    %v28 = vld [vmem:[%s1 + $0x78] sm:$0xff]
    %v29 = vmul.f32 %v12, %v12
    %vm30 = vcmask 261120
    %v31 = vsel %vm30, %v29, 0.0
    %32 = vadd.xlane.f32.xlu0 %v31
    %v33 = vpop.xlane.xlu0 %32
    %v34 = vrsqrt.pop %v33
    %v35 = vmin.f32 %v34, 1e+08
    %v36 = vmul.f32 %v13, %v13
    %v37 = vmul.f32 %v14, %v14
    %v38 = vmul.f32 %v15, %v15
    %v39 = vmul.f32 %v16, %v16
    %v40 = vmul.f32 %v17, %v17
    %v41 = vmul.f32 %v18, %v18
    %v42 = vmul.f32 %v19, %v19
    %v43 = vmul.f32 %v20, %v20
    %v44 = vmul.f32 %v21, %v21
    %v45 = vmul.f32 %v22, %v22
    %v46 = vmul.f32 %v23, %v23
    %v47 = vmul.f32 %v24, %v24
    %v48 = vmul.f32 %v25, %v25
    %v49 = vmul.f32 %v26, %v26
    %v50 = vmul.f32 %v27, %v27
    %v51 = vmul.f32 %v28, %v28
    %v52 = vsel %vm30, %v36, 0.0
    %53 = vadd.xlane.f32.xlu0 %v52
    %v54 = vpop.xlane.xlu0 %53
    %v55 = vsel %vm30, %v37, 0.0
    %56 = vadd.xlane.f32.xlu0 %v55
    %v57 = vpop.xlane.xlu0 %56
    %v58 = vsel %vm30, %v38, 0.0
    %59 = vadd.xlane.f32.xlu0 %v58
    %v60 = vpop.xlane.xlu0 %59
    %v61 = vsel %vm30, %v39, 0.0
    %62 = vadd.xlane.f32.xlu0 %v61
    %v63 = vpop.xlane.xlu0 %62
    %v64 = vsel %vm30, %v40, 0.0
    %65 = vadd.xlane.f32.xlu0 %v64
    %v66 = vpop.xlane.xlu0 %65
    %v67 = vsel %vm30, %v41, 0.0
    %68 = vadd.xlane.f32.xlu0 %v67
    %v69 = vpop.xlane.xlu0 %68
    %v70 = vsel %vm30, %v42, 0.0
    %71 = vadd.xlane.f32.xlu0 %v70
    %v72 = vpop.xlane.xlu0 %71
    %v73 = vsel %vm30, %v43, 0.0
    %74 = vadd.xlane.f32.xlu0 %v73
    %v75 = vpop.xlane.xlu0 %74
    %v76 = vsel %vm30, %v44, 0.0
    %77 = vadd.xlane.f32.xlu0 %v76
    %v78 = vpop.xlane.xlu0 %77
    %v79 = vsel %vm30, %v45, 0.0
    %80 = vadd.xlane.f32.xlu0 %v79
    %v81 = vpop.xlane.xlu0 %80
    %v82 = vsel %vm30, %v46, 0.0
    %83 = vadd.xlane.f32.xlu0 %v82
    %v84 = vpop.xlane.xlu0 %83
    %v85 = vsel %vm30, %v47, 0.0
    %86 = vadd.xlane.f32.xlu0 %v85
    %v87 = vpop.xlane.xlu0 %86
    %v88 = vsel %vm30, %v48, 0.0
    %89 = vadd.xlane.f32.xlu0 %v88
    %v90 = vpop.xlane.xlu0 %89
    %v91 = vsel %vm30, %v49, 0.0
    %92 = vadd.xlane.f32.xlu0 %v91
    %v93 = vpop.xlane.xlu0 %92
    %v94 = vsel %vm30, %v50, 0.0
    %95 = vadd.xlane.f32.xlu0 %v94
    %v96 = vpop.xlane.xlu0 %95
    %v97 = vsel %vm30, %v51, 0.0
    %98 = vadd.xlane.f32.xlu0 %v97
    %v99 = vpop.xlane.xlu0 %98
    %v100 = vrsqrt.pop %v54
    %v101 = vrsqrt.pop %v57
    %v102 = vrsqrt.pop %v60
    %v103 = vrsqrt.pop %v63
    %v104 = vrsqrt.pop %v66
    %v105 = vrsqrt.pop %v69
    %v106 = vrsqrt.pop %v72
    %v107 = vrsqrt.pop %v75
    %v108 = vrsqrt.pop %v78
    %v109 = vrsqrt.pop %v81
    %v110 = vrsqrt.pop %v84
    %v111 = vrsqrt.pop %v87
    %v112 = vrsqrt.pop %v90
    %v113 = vrsqrt.pop %v93
    %v114 = vrsqrt.pop %v96
    %v115 = vrsqrt.pop %v99
    %v116 = vmin.f32 %v100, 1e+08
    %v117 = vmin.f32 %v101, 1e+08
    %v118 = vmin.f32 %v102, 1e+08
    %v119 = vmin.f32 %v103, 1e+08
    %v120 = vmin.f32 %v104, 1e+08
    %v121 = vmin.f32 %v105, 1e+08
    %v122 = vmin.f32 %v106, 1e+08
    %v123 = vmin.f32 %v107, 1e+08
    %v124 = vmin.f32 %v108, 1e+08
    %v125 = vmin.f32 %v109, 1e+08
    %v126 = vmin.f32 %v110, 1e+08
    %v127 = vmin.f32 %v111, 1e+08
    %v128 = vmin.f32 %v112, 1e+08
    %v129 = vmin.f32 %v113, 1e+08
    %v130 = vmin.f32 %v114, 1e+08
    %v131 = vmin.f32 %v115, 1e+08
    %v132 = vmul.f32 %v12, %v35
    %v133 = vmul.f32 %v13, %v116
    %v134 = vmul.f32 %v14, %v117
    %v135 = vmul.f32 %v15, %v118
    %v136 = vmul.f32 %v16, %v119
    %v137 = vmul.f32 %v17, %v120
    %v138 = vmul.f32 %v18, %v121
    %v139 = vmul.f32 %v19, %v122
    %v140 = vmul.f32 %v20, %v123
    %v141 = vmul.f32 %v21, %v124
    %v142 = vmul.f32 %v22, %v125
    %v143 = vmul.f32 %v23, %v126
    %v144 = vmul.f32 %v24, %v127
    %v145 = vmul.f32 %v25, %v128
    %v146 = vmul.f32 %v26, %v129
    %v147 = vmul.f32 %v27, %v130
    %v148 = vmul.f32 %v28, %v131
    %v150 = vsel %vm30, %v132, 0
    %v153 = vsel %vm30, %v133, 0
    %v156 = vsel %vm30, %v134, 0
    %v159 = vsel %vm30, %v135, 0
    %v162 = vsel %vm30, %v136, 0
    %v165 = vsel %vm30, %v137, 0
    %v168 = vsel %vm30, %v138, 0
    %v171 = vsel %vm30, %v139, 0
    %v174 = vsel %vm30, %v140, 0
    %v177 = vsel %vm30, %v141, 0
    %v180 = vsel %vm30, %v142, 0
    %v183 = vsel %vm30, %v143, 0
    %v186 = vsel %vm30, %v144, 0
    %v189 = vsel %vm30, %v145, 0
    %v192 = vsel %vm30, %v146, 0
    %v195 = vsel %vm30, %v147, 0
    %v198 = vsel %vm30, %v148, 0
    %200 = vmatprep.subr.mxu0 0.0
    %201 = vmatpush1.xpose.msra.mxu0 %v153
    %202 = vmatprep.subr.mxu0 0.0
    %203 = vmatpush1.xpose.msra.mxu0 %v156
    %204 = vmatprep.subr.mxu0 0.0
    %205 = vmatpush1.xpose.msra.mxu0 %v159
    %206 = vmatprep.subr.mxu0 0.0
    %207 = vmatpush1.xpose.msra.mxu0 %v162
    %208 = vmatprep.subr.mxu0 0.0
    %209 = vmatpush1.xpose.msra.mxu0 %v165
    %210 = vmatprep.subr.mxu0 0.0
    %211 = vmatpush1.xpose.msra.mxu0 %v168
    %212 = vmatprep.subr.mxu0 0.0
    %213 = vmatpush1.xpose.msra.mxu0 %v171
    %214 = vmatprep.subr.mxu0 0.0
    %215 = vmatpush1.xpose.msra.mxu0 %v174
    %216 = vmatprep.subr.mxu0 0.0
    %217 = vmatpush1.xpose.msra.mxu0 %v177
    %218 = vmatprep.subr.mxu0 0.0
    %219 = vmatpush1.xpose.msra.mxu0 %v180
    %220 = vmatprep.subr.mxu0 0.0
    %221 = vmatpush1.xpose.msra.mxu0 %v183
    %222 = vmatprep.subr.mxu0 0.0
    %223 = vmatpush1.xpose.msra.mxu0 %v186
    %224 = vmatprep.subr.mxu0 0.0
    %225 = vmatpush1.xpose.msra.mxu0 %v189
    %226 = vmatprep.subr.mxu0 0.0
    %227 = vmatpush1.xpose.msra.mxu0 %v192
    %228 = vmatprep.subr.mxu0 0.0
    %229 = vmatpush1.xpose.msra.mxu0 %v195
    %230 = vmatprep.subr.mxu0 0.0
    %231 = vmatpush1.xpose.msra.mxu0 %v198
    %232 = vmatprep.subr.mxu0 0.0
    %233 = vmatpush1.xpose.msra.mxu0 0.0
    %234 = vmatprep.subr.mxu0 0.0
    %235 = vmatpush1.xpose.msra.mxu0 0.0
    %236 = vmatprep.subr.mxu0 0.0
    %237 = vmatpush1.xpose.msra.mxu0 0.0
    %238 = vmatprep.subr.mxu0 0.0
    %239 = vmatpush1.xpose.msra.mxu0 0.0
    %240 = vmatprep.subr.mxu0 0.0
    %241 = vmatpush1.xpose.msra.mxu0 0.0
    %242 = vmatprep.subr.mxu0 0.0
    %243 = vmatpush1.xpose.msra.mxu0 0.0
    %244 = vmatprep.subr.mxu0 0.0
    %245 = vmatpush1.xpose.msra.mxu0 0.0
    %246 = vmatprep.subr.mxu0 0.0
    %247 = vmatpush1.xpose.msra.mxu0 0.0
    %248 = vmatprep.subr.mxu0 0.0
    %249 = vmatpush1.xpose.msra.mxu0 0.0
    %250 = vmatprep.subr.mxu0 0.0
    %251 = vmatpush1.xpose.msra.mxu0 0.0
    %252 = vmatprep.subr.mxu0 0.0
    %253 = vmatpush1.xpose.msra.mxu0 0.0
    %254 = vmatprep.subr.mxu0 0.0
    %255 = vmatpush1.xpose.msra.mxu0 0.0
    %256 = vmatprep.subr.mxu0 0.0
    %257 = vmatpush1.xpose.msra.mxu0 0.0
    %258 = vmatprep.subr.mxu0 0.0
    %259 = vmatpush1.xpose.msra.mxu0 0.0
    %260 = vmatprep.subr.mxu0 0.0
    %261 = vmatpush1.xpose.msra.mxu0 0.0
    %262 = vmatprep.subr.mxu0 0.0
    %263 = vmatpush1.xpose.msra.mxu0 0.0
    %264 = vmatprep.mubr.f32.mxu0 0.0
    %265 = vmatmul.mubr.f32.gmra.mrb[0].mxu0 %v150
    %v266 = vpop.f32.mrb[0].mxu0
    %v267 = vadd.f32 0.0, %v266
    %v268 = vpop.f32.mrb[0].mxu0
    %269 = vdwg.mxu0
    %v270 = vmul.f32 %v267, 20.0
    %271 = vst [vmem:[#allocation2] sm:$0xff] %v270
    // Predicated region
    $region10: #{tpu_custom_call.1} parent=1 // pred_check
      _
    $region11: #{tpu_custom_call.1} parent=1 // pred_check_branch
      %273 = sbr.rel (0) target = $region13
    $region12: #{tpu_custom_call.1} parent=1 // pred_region
      %s275 = ssub.s32 128, 128
      %276 = vsyncadd [#allocation3], %s275
      %s278 = sshll.u32 [#allocation2], 4
      %s279 = int_to_ptr.vmem [resolvable:$true] %s278
      %281 = dma.vmem_to_hbm [thread:$0]  %s279, 128, %s2, [#allocation3]
    $region13: #{tpu_custom_call.1} parent=1 // pred_fallthru
      _
    // Predicated region
    $region14: #{tpu_custom_call.1} parent=1 // pred_check
      _
    $region15: #{tpu_custom_call.1} parent=1 // pred_check_branch
      %283 = sbr.rel (0) target = $region17
    $region16: #{tpu_custom_call.1} parent=1 // pred_region
      %284 = dma.done [#allocation3], 128
    $region17: #{tpu_custom_call.1} parent=1 // pred_fallthru
      _
    %285 = vsyncpa [#allocation3], 1

</llo_original>
